<compile_context>
chip_gen: v7x
topology: tpu7x:2x2x1
jax: 0.10.0
libtpu: 0.0.40
codegen_flags: <defaults>
</compile_context>

<pallas_src>
import jax
import jax.numpy as jnp
from jax.experimental import pallas as pl
from jax.experimental.pallas import tpu as pltpu


def channel_attention_kernel(x_ref, pool_ref, bcast_ref, w1t_ref, b1_ref,
                             w2t_ref, b2_ref, o_ref):
    # x_ref: (Bt, C*T) lane-dense tile of the flattened input.
    x = x_ref[...]
    xf = x.astype(jnp.float32)

    # Per-channel mean over time as a matmul with the (C*T, C) pooling matrix
    # (entries 1/T). Runs on the MXU; no in-kernel reshape/relayout.
    m = jnp.dot(xf, pool_ref[...], preferred_element_type=jnp.float32)          # (Bt, C)

    # Squeeze-excite MLP, batched row-vector form (weights pre-transposed).
    h = jnp.dot(m, w1t_ref[...], preferred_element_type=jnp.float32) + b1_ref[...]   # (Bt, R)
    h = jnp.maximum(h, 0.0)
    z = jnp.dot(h, w2t_ref[...], preferred_element_type=jnp.float32) + b2_ref[...]   # (Bt, C)
    attn = jax.nn.sigmoid(z)                                                     # (Bt, C)

    # Broadcast each channel's gate across its T time lanes with the (C, C*T)
    # 0/1 matrix (exact: one nonzero per column), again on the MXU.
    scale = jnp.dot(attn, bcast_ref[...], preferred_element_type=jnp.float32)    # (Bt, C*T)

    o_ref[...] = (xf * scale).astype(o_ref.dtype)


def _pick_block_b(B, target=256):
    """Multiple-of-8 batch block that keeps >= 2 grid steps when possible."""
    if B <= 8:
        return B                      # single block equal to the full dim
    bb = min(target, (B + 1) // 2)    # aim for at least 2 grid steps
    bb = max(8, (bb // 8) * 8)        # respect the (8, 128) sublane rule
    return min(bb, B)


def channel_attention(x, w1, b1, w2, b2, *, block_b=None):
    """x: (B, C, T). w1: (R, C), b1: (R,), w2: (C, R), b2: (C,) (PyTorch Linear layout)."""
    B, C, T = x.shape
    R = w1.shape[0]
    CT = C * T

    if block_b is None:
        block_b = _pick_block_b(B)
    block_b = min(block_b, B)
    grid_b = pl.cdiv(B, block_b)

    # Lane-dense flattening of the trailing (C, T) dims (free, contiguous).
    x2 = x.reshape(B, CT)

    # Constant pooling / broadcast matrices (mean over T; attn -> time lanes).
    eye = jnp.eye(C, dtype=jnp.float32)
    pool = jnp.repeat(eye, T, axis=0) / jnp.float32(T)    # (C*T, C)
    bcast = jnp.repeat(eye, T, axis=1)                    # (C, C*T)

    # Pre-transposed weights / row biases so the kernel is pure row-vector math.
    w1t = w1.T                       # (C, R)
    w2t = w2.T                       # (R, C)
    b1r = b1.reshape(1, R)
    b2r = b2.reshape(1, C)

    out2 = pl.pallas_call(
        channel_attention_kernel,
        out_shape=jax.ShapeDtypeStruct((B, CT), x.dtype),
        grid_spec=pltpu.PrefetchScalarGridSpec(
            num_scalar_prefetch=0,
            grid=(grid_b,),
            in_specs=[
                pl.BlockSpec((block_b, CT), lambda i: (i, 0)),   # x tile
                pl.BlockSpec((CT, C), lambda i: (0, 0)),         # pooling matrix (const)
                pl.BlockSpec((C, CT), lambda i: (0, 0)),         # broadcast matrix (const)
                pl.BlockSpec((C, R), lambda i: (0, 0)),          # W1^T
                pl.BlockSpec((1, R), lambda i: (0, 0)),          # b1 row
                pl.BlockSpec((R, C), lambda i: (0, 0)),          # W2^T
                pl.BlockSpec((1, C), lambda i: (0, 0)),          # b2 row
            ],
            out_specs=pl.BlockSpec((block_b, CT), lambda i: (i, 0)),
        ),
        compiler_params=pltpu.CompilerParams(
            dimension_semantics=("parallel",)),
    )(x2, pool, bcast, w1t, b1r, w2t, b2r)

    return out2.reshape(B, C, T)


def channel_attention_ref(x, w1, b1, w2, b2):
    """Pure-JAX reference mirroring the PyTorch forward."""
    attn = x.mean(axis=2)                        # (B, C)
    attn = jnp.maximum(attn @ w1.T + b1, 0.0)    # (B, R)
    attn = jax.nn.sigmoid(attn @ w2.T + b2)      # (B, C)
    return x * attn[:, :, None]


if __name__ == "__main__":
    # Small shapes consistent with the module: in_channels=16, time=32,
    # reduction = max(1, 16 // 8) = 2. B=16 so the batch-blocked grid has 2 steps.
    B, C, T = 16, 16, 32
    R = max(1, C // 8)

    key = jax.random.PRNGKey(0)
    kx, k1, k2, k3, k4 = jax.random.split(key, 5)

    x = jax.random.normal(kx, (B, C, T), dtype=jnp.float32)
    # Deterministic synthetic parameters (PyTorch nn.Linear layout: (out, in)).
    w1 = jax.random.normal(k1, (R, C), dtype=jnp.float32) * 0.2
    b1 = jax.random.normal(k2, (R,), dtype=jnp.float32) * 0.1
    w2 = jax.random.normal(k3, (C, R), dtype=jnp.float32) * 0.2
    b2 = jax.random.normal(k4, (C,), dtype=jnp.float32) * 0.1

    out = channel_attention(x, w1, b1, w2, b2)
    out = jax.block_until_ready(out)

    ref = channel_attention_ref(x, w1, b1, w2, b2)
    assert out.shape == (B, C, T)
    assert jnp.allclose(out, ref, atol=1e-5, rtol=1e-5), "mismatch vs reference"

    print("KERNEL_OK")
</pallas_src>

<mosaic_0001>
module attributes {stable_mosaic.version = 11 : i64} {
  func.func @channel_attention_kernel(%arg0: i32, %arg1: memref<8x512xf32, #tpu.memory_space<vmem>>, %arg2: memref<512x16xf32, #tpu.memory_space<vmem>>, %arg3: memref<16x512xf32, #tpu.memory_space<vmem>>, %arg4: memref<16x2xf32, #tpu.memory_space<vmem>>, %arg5: memref<1x2xf32, #tpu.memory_space<vmem>>, %arg6: memref<2x16xf32, #tpu.memory_space<vmem>>, %arg7: memref<1x16xf32, #tpu.memory_space<vmem>>, %arg8: memref<8x512xf32, #tpu.memory_space<vmem>>) attributes {dimension_semantics = [#tpu.dimension_semantics<parallel>], iteration_bounds = array<i64: 2>, scalar_prefetch = 0 : i64, scratch_operands = 0 : i64, tpu.core_type = #tpu.core_type<tc>, window_params = [{transform_indices = @transform_0, window_bounds = array<i64: 8, 512>}, {pipeline_mode = #tpu.pipeline_mode<synchronous>, transform_indices = @transform_1, window_bounds = array<i64: 512, 16>}, {pipeline_mode = #tpu.pipeline_mode<synchronous>, transform_indices = @transform_2, window_bounds = array<i64: 16, 512>}, {pipeline_mode = #tpu.pipeline_mode<synchronous>, transform_indices = @transform_3, window_bounds = array<i64: 16, 2>}, {pipeline_mode = #tpu.pipeline_mode<synchronous>, transform_indices = @transform_4, window_bounds = array<i64: 1, 2>}, {pipeline_mode = #tpu.pipeline_mode<synchronous>, transform_indices = @transform_5, window_bounds = array<i64: 2, 16>}, {pipeline_mode = #tpu.pipeline_mode<synchronous>, transform_indices = @transform_6, window_bounds = array<i64: 1, 16>}, {transform_indices = @transform_7, window_bounds = array<i64: 8, 512>}]} {
    %c0 = arith.constant 0 : index
    %c0_0 = arith.constant 0 : index
    %0 = vector.load %arg1[%c0, %c0_0] : memref<8x512xf32, #tpu.memory_space<vmem>>, vector<8x512xf32>
    %c0_1 = arith.constant 0 : index
    %c0_2 = arith.constant 0 : index
    %1 = vector.load %arg2[%c0_1, %c0_2] : memref<512x16xf32, #tpu.memory_space<vmem>>, vector<512x16xf32>
    %cst = arith.constant dense<0.000000e+00> : vector<8x16xf32>
    %2 = tpu.matmul %0, %1, %cst {dimension_numbers = #tpu.dot_dimension_numbers<[1], [0], [0], [1], [0, 0, 1, 1], [], []>} : vector<8x512xf32>, vector<512x16xf32>, vector<8x16xf32> -> vector<8x16xf32>
    %c0_3 = arith.constant 0 : index
    %c0_4 = arith.constant 0 : index
    %3 = vector.load %arg4[%c0_3, %c0_4] : memref<16x2xf32, #tpu.memory_space<vmem>>, vector<16x2xf32>
    %cst_5 = arith.constant dense<0.000000e+00> : vector<8x2xf32>
    %4 = tpu.matmul %2, %3, %cst_5 {dimension_numbers = #tpu.dot_dimension_numbers<[1], [0], [0], [1], [0, 0, 1, 1], [], []>} : vector<8x16xf32>, vector<16x2xf32>, vector<8x2xf32> -> vector<8x2xf32>
    %c0_6 = arith.constant 0 : index
    %c0_7 = arith.constant 0 : index
    %5 = vector.load %arg5[%c0_6, %c0_7] : memref<1x2xf32, #tpu.memory_space<vmem>>, vector<1x2xf32>
    %6 = vector.broadcast %5 : vector<1x2xf32> to vector<8x2xf32>
    %7 = arith.addf %4, %6 : vector<8x2xf32>
    %cst_8 = arith.constant 0.000000e+00 : f32
    %8 = vector.broadcast %cst_8 : f32 to vector<8x2xf32>
    %9 = arith.maximumf %7, %8 : vector<8x2xf32>
    %c0_9 = arith.constant 0 : index
    %c0_10 = arith.constant 0 : index
    %10 = vector.load %arg6[%c0_9, %c0_10] : memref<2x16xf32, #tpu.memory_space<vmem>>, vector<2x16xf32>
    %cst_11 = arith.constant dense<0.000000e+00> : vector<8x16xf32>
    %11 = tpu.matmul %9, %10, %cst_11 {dimension_numbers = #tpu.dot_dimension_numbers<[1], [0], [0], [1], [0, 0, 1, 1], [], []>} : vector<8x2xf32>, vector<2x16xf32>, vector<8x16xf32> -> vector<8x16xf32>
    %c0_12 = arith.constant 0 : index
    %c0_13 = arith.constant 0 : index
    %12 = vector.load %arg7[%c0_12, %c0_13] : memref<1x16xf32, #tpu.memory_space<vmem>>, vector<1x16xf32>
    %13 = vector.broadcast %12 : vector<1x16xf32> to vector<8x16xf32>
    %14 = arith.addf %11, %13 : vector<8x16xf32>
    %15 = arith.negf %14 : vector<8x16xf32>
    %16 = math.exp %15 : vector<8x16xf32>
    %cst_14 = arith.constant 1.000000e+00 : f32
    %17 = vector.broadcast %cst_14 : f32 to vector<8x16xf32>
    %18 = arith.addf %17, %16 : vector<8x16xf32>
    %19 = arith.divf %17, %18 : vector<8x16xf32>
    %c0_15 = arith.constant 0 : index
    %c0_16 = arith.constant 0 : index
    %20 = vector.load %arg3[%c0_15, %c0_16] : memref<16x512xf32, #tpu.memory_space<vmem>>, vector<16x512xf32>
    %cst_17 = arith.constant dense<0.000000e+00> : vector<8x512xf32>
    %21 = tpu.matmul %19, %20, %cst_17 {dimension_numbers = #tpu.dot_dimension_numbers<[1], [0], [0], [1], [0, 0, 1, 1], [], []>} : vector<8x16xf32>, vector<16x512xf32>, vector<8x512xf32> -> vector<8x512xf32>
    %22 = arith.mulf %0, %21 : vector<8x512xf32>
    %c0_18 = arith.constant 0 : index
    %c0_19 = arith.constant 0 : index
    %23 = vector.load %arg8[%c0_18, %c0_19] : memref<8x512xf32, #tpu.memory_space<vmem>>, vector<8x512xf32>
    tpu.vector_store %arg8[%c0_18, %c0_19], %22 {strides = array<i32>} : memref<8x512xf32, #tpu.memory_space<vmem>>, vector<8x512xf32>,
    return
  }
  func.func @transform_0(%arg0: i32) -> (i32, i32) {
    %c0_i32 = arith.constant 0 : i32
    %c0_i32_0 = arith.constant 0 : i32
    return %arg0, %c0_i32 : i32, i32
  }
  func.func @transform_1(%arg0: i32) -> (i32, i32) {
    %c0_i32 = arith.constant 0 : i32
    %c0_i32_0 = arith.constant 0 : i32
    %c0_i32_1 = arith.constant 0 : i32
    return %c0_i32, %c0_i32_0 : i32, i32
  }
  func.func @transform_2(%arg0: i32) -> (i32, i32) {
    %c0_i32 = arith.constant 0 : i32
    %c0_i32_0 = arith.constant 0 : i32
    %c0_i32_1 = arith.constant 0 : i32
    return %c0_i32, %c0_i32_0 : i32, i32
  }
  func.func @transform_3(%arg0: i32) -> (i32, i32) {
    %c0_i32 = arith.constant 0 : i32
    %c0_i32_0 = arith.constant 0 : i32
    %c0_i32_1 = arith.constant 0 : i32
    return %c0_i32, %c0_i32_0 : i32, i32
  }
  func.func @transform_4(%arg0: i32) -> (i32, i32) {
    %c0_i32 = arith.constant 0 : i32
    %c0_i32_0 = arith.constant 0 : i32
    %c0_i32_1 = arith.constant 0 : i32
    return %c0_i32, %c0_i32_0 : i32, i32
  }
  func.func @transform_5(%arg0: i32) -> (i32, i32) {
    %c0_i32 = arith.constant 0 : i32
    %c0_i32_0 = arith.constant 0 : i32
    %c0_i32_1 = arith.constant 0 : i32
    return %c0_i32, %c0_i32_0 : i32, i32
  }
  func.func @transform_6(%arg0: i32) -> (i32, i32) {
    %c0_i32 = arith.constant 0 : i32
    %c0_i32_0 = arith.constant 0 : i32
    %c0_i32_1 = arith.constant 0 : i32
    return %c0_i32, %c0_i32_0 : i32, i32
  }
  func.func @transform_7(%arg0: i32) -> (i32, i32) {
    %c0_i32 = arith.constant 0 : i32
    %c0_i32_0 = arith.constant 0 : i32
    return %arg0, %c0_i32 : i32, i32
  }
}

</mosaic_0001>

<llo_original>
// kernel: tpu_custom_call.1
$region0: #{tpu_custom_call.1}
  #allocation0 [shape = 'u32[]', space=smem, size = 0x4, offset = 0x4, fixed_abs, tag = 'smem constant byte address 0x4 - core index']
  #allocation1 [shape = 'u32[144,128]{1,0:T(1,128)}', space=vmem, size = 0x12000, scoped, tag = 'internal scratch']
  %s0 = inlined_call_operand.vmem [shape: f32[16,512], index: 0, kind: input, shape index: {}]
  %s1 = inlined_call_operand.vmem [shape: f32[512,16], index: 1, kind: input, shape index: {}]
  %s2 = inlined_call_operand.vmem [shape: f32[16,512], index: 2, kind: input, shape index: {}]
  %s3 = inlined_call_operand.vmem [shape: f32[16,2], index: 3, kind: input, shape index: {}]
  %s4 = inlined_call_operand.vmem [shape: f32[1,2], index: 4, kind: input, shape index: {}]
  %s5 = inlined_call_operand.vmem [shape: f32[2,16], index: 5, kind: input, shape index: {}]
  %s6 = inlined_call_operand.vmem [shape: f32[1,16], index: 6, kind: input, shape index: {}]
  %s7 = inlined_call_operand.hbm [shape: f32[16,512], index: 7, kind: output, shape index: {}]
  %s8 = sld [smem:[#allocation0]]
  $region61: #{tpu_custom_call.1} parent=0
    _
  %s10 = ssub.s32 1, %s8
  %s11 = scalar_select 0, %s10, %s8
  $region1: #{tpu_custom_call.1} parent=0
    #allocation2 [shape = 'u8[32768]{0}', space=vmem, size = 0x8000, scoped, tag = 'output window, operand 0']
    #allocation3 [shape = 's32[2]{0}', space=sflag, size = 0x8, scoped, tag = 'scoped memory for tpu_custom_call.1']
    %12 = vsyncpa [#allocation3], 0
    %s13 = scalar_lea.sflag [#allocation3], 1
    %14 = vsyncpa %s13, 0
    loop: start=0, step=1, limit=4
    $region2: #{tpu_custom_call.1} parent=1 // loop_pre_header
      _
    $region3: #{tpu_custom_call.1} parent=1 // loop_header
      %s16 = sphi 0, %s20
      %p17 = scmp.ge.s32.totalorder %s16, 4
      %s26 = sphi 0, %s28
      %s29 = sphi 0, %s26
      %s30 = sphi 0, %s29
      %s46 = sphi 0, %s30
      %s50 = sphi 0, %s50
      %s52 = sphi 0, %s50
      %s53 = sphi 0, %s52
      %s67 = sphi 0, %s53
      %s71 = sphi 0, %s71
      %s73 = sphi 0, %s71
      %s74 = sphi 0, %s73
      %s88 = sphi 0, %s74
      %s92 = sphi 0, %s92
      %s94 = sphi 0, %s92
      %s95 = sphi 0, %s94
      %s109 = sphi 0, %s95
      %s113 = sphi 0, %s113
      %s115 = sphi 0, %s113
      %s116 = sphi 0, %s115
      %s130 = sphi 0, %s116
      %s134 = sphi 0, %s134
      %s136 = sphi 0, %s134
      %s137 = sphi 0, %s136
      %s151 = sphi 0, %s137
      %s155 = sphi 0, %s155
      %s157 = sphi 0, %s155
      %s158 = sphi 0, %s157
      %s172 = sphi 0, %s158
      %s178 = sphi 0, %s180
      %s181 = sphi 0, %s178
      %s182 = sphi 0, %s181
      %s198 = sphi 0, %s182
    $region4: #{tpu_custom_call.1} parent=1 // loop_header_branch
      %19 = sbr.rel (%p17) target = $region8
    $region5: #{tpu_custom_call.1} parent=1 // loop_body
      %s21 = ssub.s32 %s16, 1
      %s22 = ssub.s32 %s16, 2
      %s23 = sadd.s32 %s16, 1
      %s24 = ssub.s32 %s16, %s23
      %p25 = scmp.eq.s32.totalorder %s24, 0
      %s27 = sadd.s32 %s26, 1
      %s28 = scalar_select %p25, %s26, %s27
      %p31 = pneg %p25
      %p32 = scmp.eq.s32.totalorder %s16, 1
      %p33 = por %p31, %p32
      %p34 = scmp.ne.s32.totalorder %s26, %s29
      %p35 = scmp.eq.s32.totalorder %s16, 0
      %p36 = por %p34, %p35
      %p37 = scmp.ne.s32.totalorder %s26, %s29
      %p38 = scmp.eq.s32.totalorder %s21, 1
      %p39 = por %p37, %p38
      %p40 = scmp.ne.s32.totalorder %s29, %s30
      %p41 = scmp.eq.s32.totalorder %s21, 0
      %p42 = por %p40, %p41
      %p43 = scmp.ne.s32.totalorder %s29, %s30
      %p44 = scmp.eq.s32.totalorder %s22, 1
      %p45 = por %p43, %p44
      %p47 = scmp.ne.s32.totalorder %s30, %s46
      %p48 = scmp.eq.s32.totalorder %s22, 0
      %p49 = por %p47, %p48
      %s51 = sadd.s32 %s50, 1
      %p54 = scmp.eq.s32.totalorder %s16, 1
      %p55 = scmp.ne.s32.totalorder %s50, %s52
      %p56 = scmp.eq.s32.totalorder %s16, 0
      %p57 = por %p55, %p56
      %p58 = scmp.ne.s32.totalorder %s50, %s52
      %p59 = scmp.eq.s32.totalorder %s21, 1
      %p60 = por %p58, %p59
      %p61 = scmp.ne.s32.totalorder %s52, %s53
      %p62 = scmp.eq.s32.totalorder %s21, 0
      %p63 = por %p61, %p62
      %p64 = scmp.ne.s32.totalorder %s52, %s53
      %p65 = scmp.eq.s32.totalorder %s22, 1
      %p66 = por %p64, %p65
      %p68 = scmp.ne.s32.totalorder %s53, %s67
      %p69 = scmp.eq.s32.totalorder %s22, 0
      %p70 = por %p68, %p69
      %s72 = sadd.s32 %s71, 1
      %p75 = scmp.eq.s32.totalorder %s16, 1
      %p76 = scmp.ne.s32.totalorder %s71, %s73
      %p77 = scmp.eq.s32.totalorder %s16, 0
      %p78 = por %p76, %p77
      %p79 = scmp.ne.s32.totalorder %s71, %s73
      %p80 = scmp.eq.s32.totalorder %s21, 1
      %p81 = por %p79, %p80
      %p82 = scmp.ne.s32.totalorder %s73, %s74
      %p83 = scmp.eq.s32.totalorder %s21, 0
      %p84 = por %p82, %p83
      %p85 = scmp.ne.s32.totalorder %s73, %s74
      %p86 = scmp.eq.s32.totalorder %s22, 1
      %p87 = por %p85, %p86
      %p89 = scmp.ne.s32.totalorder %s74, %s88
      %p90 = scmp.eq.s32.totalorder %s22, 0
      %p91 = por %p89, %p90
      %s93 = sadd.s32 %s92, 1
      %p96 = scmp.eq.s32.totalorder %s16, 1
      %p97 = scmp.ne.s32.totalorder %s92, %s94
      %p98 = scmp.eq.s32.totalorder %s16, 0
      %p99 = por %p97, %p98
      %p100 = scmp.ne.s32.totalorder %s92, %s94
      %p101 = scmp.eq.s32.totalorder %s21, 1
      %p102 = por %p100, %p101
      %p103 = scmp.ne.s32.totalorder %s94, %s95
      %p104 = scmp.eq.s32.totalorder %s21, 0
      %p105 = por %p103, %p104
      %p106 = scmp.ne.s32.totalorder %s94, %s95
      %p107 = scmp.eq.s32.totalorder %s22, 1
      %p108 = por %p106, %p107
      %p110 = scmp.ne.s32.totalorder %s95, %s109
      %p111 = scmp.eq.s32.totalorder %s22, 0
      %p112 = por %p110, %p111
      %s114 = sadd.s32 %s113, 1
      %p117 = scmp.eq.s32.totalorder %s16, 1
      %p118 = scmp.ne.s32.totalorder %s113, %s115
      %p119 = scmp.eq.s32.totalorder %s16, 0
      %p120 = por %p118, %p119
      %p121 = scmp.ne.s32.totalorder %s113, %s115
      %p122 = scmp.eq.s32.totalorder %s21, 1
      %p123 = por %p121, %p122
      %p124 = scmp.ne.s32.totalorder %s115, %s116
      %p125 = scmp.eq.s32.totalorder %s21, 0
      %p126 = por %p124, %p125
      %p127 = scmp.ne.s32.totalorder %s115, %s116
      %p128 = scmp.eq.s32.totalorder %s22, 1
      %p129 = por %p127, %p128
      %p131 = scmp.ne.s32.totalorder %s116, %s130
      %p132 = scmp.eq.s32.totalorder %s22, 0
      %p133 = por %p131, %p132
      %s135 = sadd.s32 %s134, 1
      %p138 = scmp.eq.s32.totalorder %s16, 1
      %p139 = scmp.ne.s32.totalorder %s134, %s136
      %p140 = scmp.eq.s32.totalorder %s16, 0
      %p141 = por %p139, %p140
      %p142 = scmp.ne.s32.totalorder %s134, %s136
      %p143 = scmp.eq.s32.totalorder %s21, 1
      %p144 = por %p142, %p143
      %p145 = scmp.ne.s32.totalorder %s136, %s137
      %p146 = scmp.eq.s32.totalorder %s21, 0
      %p147 = por %p145, %p146
      %p148 = scmp.ne.s32.totalorder %s136, %s137
      %p149 = scmp.eq.s32.totalorder %s22, 1
      %p150 = por %p148, %p149
      %p152 = scmp.ne.s32.totalorder %s137, %s151
      %p153 = scmp.eq.s32.totalorder %s22, 0
      %p154 = por %p152, %p153
      %s156 = sadd.s32 %s155, 1
      %p159 = scmp.eq.s32.totalorder %s16, 1
      %p160 = scmp.ne.s32.totalorder %s155, %s157
      %p161 = scmp.eq.s32.totalorder %s16, 0
      %p162 = por %p160, %p161
      %p163 = scmp.ne.s32.totalorder %s155, %s157
      %p164 = scmp.eq.s32.totalorder %s21, 1
      %p165 = por %p163, %p164
      %p166 = scmp.ne.s32.totalorder %s157, %s158
      %p167 = scmp.eq.s32.totalorder %s21, 0
      %p168 = por %p166, %p167
      %p169 = scmp.ne.s32.totalorder %s157, %s158
      %p170 = scmp.eq.s32.totalorder %s22, 1
      %p171 = por %p169, %p170
      %p173 = scmp.ne.s32.totalorder %s158, %s172
      %p174 = scmp.eq.s32.totalorder %s22, 0
      %p175 = por %p173, %p174
      %s176 = ssub.s32 %s16, %s23
      %p177 = scmp.eq.s32.totalorder %s176, 0
      %s179 = sadd.s32 %s178, 1
      %s180 = scalar_select %p177, %s178, %s179
      %p183 = pneg %p177
      %p184 = scmp.eq.s32.totalorder %s16, 1
      %p185 = por %p183, %p184
      %p186 = scmp.ne.s32.totalorder %s178, %s181
      %p187 = scmp.eq.s32.totalorder %s16, 0
      %p188 = por %p186, %p187
      %p189 = scmp.ne.s32.totalorder %s178, %s181
      %p190 = scmp.eq.s32.totalorder %s21, 1
      %p191 = por %p189, %p190
      %p192 = scmp.ne.s32.totalorder %s181, %s182
      %p193 = scmp.eq.s32.totalorder %s21, 0
      %p194 = por %p192, %p193
      %p195 = scmp.ne.s32.totalorder %s181, %s182
      %p196 = scmp.eq.s32.totalorder %s22, 1
      %p197 = por %p195, %p196
      %p199 = scmp.ne.s32.totalorder %s182, %s198
      %p200 = scmp.eq.s32.totalorder %s22, 0
      %p201 = por %p199, %p200
      %p202 = scmp.le.s32.totalorder 1, %s16
      %p203 = scmp.lt.s32.totalorder %s16, 3
      %p204 = pnand %p202, %p203
      %p205 = pneg %p204
      // Predicated region
      $region9: #{tpu_custom_call.1} parent=5 // pred_check
        _
      $region10: #{tpu_custom_call.1} parent=5 // pred_check_branch
        %207 = sbr.rel (%p204) target = $region12
      $region11: #{tpu_custom_call.1} parent=5 // pred_region
        %s208 = ssub.s32 %s16, 1
        // Predicated region
        $region13: #{tpu_custom_call.1} parent=11 // pred_check
          %p209 = pneg %p63
        $region14: #{tpu_custom_call.1} parent=11 // pred_check_branch
          %211 = sbr.rel (%p209) target = $region16
        $region15: #{tpu_custom_call.1} parent=11 // pred_region
          _
        $region16: #{tpu_custom_call.1} parent=11 // pred_fallthru
          _
        // Predicated region
        $region17: #{tpu_custom_call.1} parent=11 // pred_check
          %p212 = pneg %p84
        $region18: #{tpu_custom_call.1} parent=11 // pred_check_branch
          %214 = sbr.rel (%p212) target = $region20
        $region19: #{tpu_custom_call.1} parent=11 // pred_region
          _
        $region20: #{tpu_custom_call.1} parent=11 // pred_fallthru
          _
        // Predicated region
        $region21: #{tpu_custom_call.1} parent=11 // pred_check
          %p215 = pneg %p105
        $region22: #{tpu_custom_call.1} parent=11 // pred_check_branch
          %217 = sbr.rel (%p215) target = $region24
        $region23: #{tpu_custom_call.1} parent=11 // pred_region
          _
        $region24: #{tpu_custom_call.1} parent=11 // pred_fallthru
          _
        // Predicated region
        $region25: #{tpu_custom_call.1} parent=11 // pred_check
          %p218 = pneg %p126
        $region26: #{tpu_custom_call.1} parent=11 // pred_check_branch
          %220 = sbr.rel (%p218) target = $region28
        $region27: #{tpu_custom_call.1} parent=11 // pred_region
          _
        $region28: #{tpu_custom_call.1} parent=11 // pred_fallthru
          _
        // Predicated region
        $region29: #{tpu_custom_call.1} parent=11 // pred_check
          %p221 = pneg %p147
        $region30: #{tpu_custom_call.1} parent=11 // pred_check_branch
          %223 = sbr.rel (%p221) target = $region32
        $region31: #{tpu_custom_call.1} parent=11 // pred_region
          _
        $region32: #{tpu_custom_call.1} parent=11 // pred_fallthru
          _
        // Predicated region
        $region33: #{tpu_custom_call.1} parent=11 // pred_check
          %p224 = pneg %p168
        $region34: #{tpu_custom_call.1} parent=11 // pred_check_branch
          %226 = sbr.rel (%p224) target = $region36
        $region35: #{tpu_custom_call.1} parent=11 // pred_region
          _
        $region36: #{tpu_custom_call.1} parent=11 // pred_fallthru
          _
      $region12: #{tpu_custom_call.1} parent=5 // pred_fallthru
        _
      %p227 = scmp.lt.s32.totalorder %s16, 2
      // Predicated region
      $region37: #{tpu_custom_call.1} parent=5 // pred_check
        %p228 = pneg %p227
      $region38: #{tpu_custom_call.1} parent=5 // pred_check_branch
        %230 = sbr.rel (%p228) target = $region40
      $region39: #{tpu_custom_call.1} parent=5 // pred_region
        // Predicated region
        $region41: #{tpu_custom_call.1} parent=39 // pred_check
          %p231 = pneg %p36
        $region42: #{tpu_custom_call.1} parent=39 // pred_check_branch
          %233 = sbr.rel (%p231) target = $region44
        $region43: #{tpu_custom_call.1} parent=39 // pred_region
          %p234 = scmp.lt.s32.totalorder %s16, 1
          %s235 = scalar_select %p234, %s16, 1
          %s236 = smul.addr %s235, 4
          %s237 = smul.addr %s236, 8
          %s238 = scalar_lea.vmem %s0, %s237
        $region44: #{tpu_custom_call.1} parent=39 // pred_fallthru
          _
      $region40: #{tpu_custom_call.1} parent=5 // pred_fallthru
        _
      %p239 = scmp.le.s32.totalorder 1, %s16
      %p240 = scmp.lt.s32.totalorder %s16, 3
      %p241 = pnand %p239, %p240
      %p242 = pneg %p241
      // Predicated region
      $region45: #{tpu_custom_call.1} parent=5 // pred_check
        _
      $region46: #{tpu_custom_call.1} parent=5 // pred_check_branch
        %244 = sbr.rel (%p241) target = $region48
      $region47: #{tpu_custom_call.1} parent=5 // pred_region
        %s245 = ssub.s32 %s16, 1
        %p246 = scmp.lt.s32.totalorder %s21, 1
        %s247 = scalar_select %p246, %s21, 1
        %s248 = smul.addr %s247, 4
        %s249 = smul.addr %s248, 8
        %s250 = scalar_lea.vmem %s0, %s249
        %p251 = pneg %p42
        %p252 = pneg %p39
        %p253 = pneg %p63
        %p254 = pneg %p60
        %p255 = pneg %p84
        %p256 = pneg %p81
        %p257 = pneg %p105
        %p258 = pneg %p102
        %p259 = pneg %p126
        %p260 = pneg %p123
        %p261 = pneg %p147
        %p262 = pneg %p144
        %p263 = pneg %p168
        %p264 = pneg %p165
        %p265 = pneg %p194
        %p266 = pneg %p191
        %s267 = sand.u32 %s181, 1
        %s268 = scalar_lea.sflag [#allocation3], %s267
        %s269 = sand.u32 %s181, 1
        %s270 = smul.addr %s269, 32
        %s271 = scalar_lea.vmem [#allocation2], %s270
        %p272 = scmp.lt.s32.totalorder %s21, 1
        %s273 = scalar_select %p272, %s21, 1
        %s274 = smul.addr %s273, 4
        %s275 = smul.addr %s274, 8
        %s276 = scalar_lea.vmem %s0, %s275
        %v277 = vld [vmem:[%s276] sm:$0xff]
        %v278 = vld [vmem:[%s276 + $0x8] sm:$0xff]
        %v279 = vld [vmem:[%s276 + $0x10] sm:$0xff]
        %v280 = vld [vmem:[%s276 + $0x18] sm:$0xff]
        %v281 = vld [vmem:[%s1] sm:$0xff]
        %v282 = vld [vmem:[%s1 + $0x8] sm:$0xff]
        %v283 = vld [vmem:[%s1 + $0x10] sm:$0xff]
        %v284 = vld [vmem:[%s1 + $0x18] sm:$0xff]
        %v285 = vld [vmem:[%s1 + $0x20] sm:$0xff]
        %v286 = vld [vmem:[%s1 + $0x28] sm:$0xff]
        %v287 = vld [vmem:[%s1 + $0x30] sm:$0xff]
        %v288 = vld [vmem:[%s1 + $0x38] sm:$0xff]
        %v289 = vld [vmem:[%s1 + $0x40] sm:$0xff]
        %v290 = vld [vmem:[%s1 + $0x48] sm:$0xff]
        %v291 = vld [vmem:[%s1 + $0x50] sm:$0xff]
        %v292 = vld [vmem:[%s1 + $0x58] sm:$0xff]
        %v293 = vld [vmem:[%s1 + $0x60] sm:$0xff]
        %v294 = vld [vmem:[%s1 + $0x68] sm:$0xff]
        %v295 = vld [vmem:[%s1 + $0x70] sm:$0xff]
        %v296 = vld [vmem:[%s1 + $0x78] sm:$0xff]
        %v297 = vld [vmem:[%s1 + $0x80] sm:$0xff]
        %v298 = vld [vmem:[%s1 + $0x88] sm:$0xff]
        %v299 = vld [vmem:[%s1 + $0x90] sm:$0xff]
        %v300 = vld [vmem:[%s1 + $0x98] sm:$0xff]
        %v301 = vld [vmem:[%s1 + $0xa0] sm:$0xff]
        %v302 = vld [vmem:[%s1 + $0xa8] sm:$0xff]
        %v303 = vld [vmem:[%s1 + $0xb0] sm:$0xff]
        %v304 = vld [vmem:[%s1 + $0xb8] sm:$0xff]
        %v305 = vld [vmem:[%s1 + $0xc0] sm:$0xff]
        %v306 = vld [vmem:[%s1 + $0xc8] sm:$0xff]
        %v307 = vld [vmem:[%s1 + $0xd0] sm:$0xff]
        %v308 = vld [vmem:[%s1 + $0xd8] sm:$0xff]
        %v309 = vld [vmem:[%s1 + $0xe0] sm:$0xff]
        %v310 = vld [vmem:[%s1 + $0xe8] sm:$0xff]
        %v311 = vld [vmem:[%s1 + $0xf0] sm:$0xff]
        %v312 = vld [vmem:[%s1 + $0xf8] sm:$0xff]
        %v313 = vld [vmem:[%s1 + $0x100] sm:$0xff]
        %v314 = vld [vmem:[%s1 + $0x108] sm:$0xff]
        %v315 = vld [vmem:[%s1 + $0x110] sm:$0xff]
        %v316 = vld [vmem:[%s1 + $0x118] sm:$0xff]
        %v317 = vld [vmem:[%s1 + $0x120] sm:$0xff]
        %v318 = vld [vmem:[%s1 + $0x128] sm:$0xff]
        %v319 = vld [vmem:[%s1 + $0x130] sm:$0xff]
        %v320 = vld [vmem:[%s1 + $0x138] sm:$0xff]
        %v321 = vld [vmem:[%s1 + $0x140] sm:$0xff]
        %v322 = vld [vmem:[%s1 + $0x148] sm:$0xff]
        %v323 = vld [vmem:[%s1 + $0x150] sm:$0xff]
        %v324 = vld [vmem:[%s1 + $0x158] sm:$0xff]
        %v325 = vld [vmem:[%s1 + $0x160] sm:$0xff]
        %v326 = vld [vmem:[%s1 + $0x168] sm:$0xff]
        %v327 = vld [vmem:[%s1 + $0x170] sm:$0xff]
        %v328 = vld [vmem:[%s1 + $0x178] sm:$0xff]
        %v329 = vld [vmem:[%s1 + $0x180] sm:$0xff]
        %v330 = vld [vmem:[%s1 + $0x188] sm:$0xff]
        %v331 = vld [vmem:[%s1 + $0x190] sm:$0xff]
        %v332 = vld [vmem:[%s1 + $0x198] sm:$0xff]
        %v333 = vld [vmem:[%s1 + $0x1a0] sm:$0xff]
        %v334 = vld [vmem:[%s1 + $0x1a8] sm:$0xff]
        %v335 = vld [vmem:[%s1 + $0x1b0] sm:$0xff]
        %v336 = vld [vmem:[%s1 + $0x1b8] sm:$0xff]
        %v337 = vld [vmem:[%s1 + $0x1c0] sm:$0xff]
        %v338 = vld [vmem:[%s1 + $0x1c8] sm:$0xff]
        %v339 = vld [vmem:[%s1 + $0x1d0] sm:$0xff]
        %v340 = vld [vmem:[%s1 + $0x1d8] sm:$0xff]
        %v341 = vld [vmem:[%s1 + $0x1e0] sm:$0xff]
        %v342 = vld [vmem:[%s1 + $0x1e8] sm:$0xff]
        %v343 = vld [vmem:[%s1 + $0x1f0] sm:$0xff]
        %v344 = vld [vmem:[%s1 + $0x1f8] sm:$0xff]
        %345 = vmatprep.subr.mxu0 0.0
        %346 = vmatpush1.msra.mxu0 %v281
        %347 = vmatprep.subr.mxu0 0.0
        %348 = vmatpush1.msra.mxu0 %v282
        %349 = vmatprep.subr.mxu0 0.0
        %350 = vmatpush1.msra.mxu0 %v283
        %351 = vmatprep.subr.mxu0 0.0
        %352 = vmatpush1.msra.mxu0 %v284
        %353 = vmatprep.subr.mxu0 0.0
        %354 = vmatpush1.msra.mxu0 %v285
        %355 = vmatprep.subr.mxu0 0.0
        %356 = vmatpush1.msra.mxu0 %v286
        %357 = vmatprep.subr.mxu0 0.0
        %358 = vmatpush1.msra.mxu0 %v287
        %359 = vmatprep.subr.mxu0 0.0
        %360 = vmatpush1.msra.mxu0 %v288
        %361 = vmatprep.subr.mxu0 0.0
        %362 = vmatpush1.msra.mxu0 %v289
        %363 = vmatprep.subr.mxu0 0.0
        %364 = vmatpush1.msra.mxu0 %v290
        %365 = vmatprep.subr.mxu0 0.0
        %366 = vmatpush1.msra.mxu0 %v291
        %367 = vmatprep.subr.mxu0 0.0
        %368 = vmatpush1.msra.mxu0 %v292
        %369 = vmatprep.subr.mxu0 0.0
        %370 = vmatpush1.msra.mxu0 %v293
        %371 = vmatprep.subr.mxu0 0.0
        %372 = vmatpush1.msra.mxu0 %v294
        %373 = vmatprep.subr.mxu0 0.0
        %374 = vmatpush1.msra.mxu0 %v295
        %375 = vmatprep.subr.mxu0 0.0
        %376 = vmatpush1.msra.mxu0 %v296
        %377 = vmatprep.subr.mxu0 0.0
        %378 = vmatpush1.msra.mxu0 %v297
        %379 = vmatprep.subr.mxu0 0.0
        %380 = vmatpush1.msra.mxu0 %v298
        %381 = vmatprep.subr.mxu0 0.0
        %382 = vmatpush1.msra.mxu0 %v299
        %383 = vmatprep.subr.mxu0 0.0
        %384 = vmatpush1.msra.mxu0 %v300
        %385 = vmatprep.subr.mxu0 0.0
        %386 = vmatpush1.msra.mxu0 %v301
        %387 = vmatprep.subr.mxu0 0.0
        %388 = vmatpush1.msra.mxu0 %v302
        %389 = vmatprep.subr.mxu0 0.0
        %390 = vmatpush1.msra.mxu0 %v303
        %391 = vmatprep.subr.mxu0 0.0
        %392 = vmatpush1.msra.mxu0 %v304
        %393 = vmatprep.subr.mxu0 0.0
        %394 = vmatpush1.msra.mxu0 %v305
        %395 = vmatprep.subr.mxu0 0.0
        %396 = vmatpush1.msra.mxu0 %v306
        %397 = vmatprep.subr.mxu0 0.0
        %398 = vmatpush1.msra.mxu0 %v307
        %399 = vmatprep.subr.mxu0 0.0
        %400 = vmatpush1.msra.mxu0 %v308
        %401 = vmatprep.subr.mxu0 0.0
        %402 = vmatpush1.msra.mxu0 %v309
        %403 = vmatprep.subr.mxu0 0.0
        %404 = vmatpush1.msra.mxu0 %v310
        %405 = vmatprep.subr.mxu0 0.0
        %406 = vmatpush1.msra.mxu0 %v311
        %407 = vmatprep.subr.mxu0 0.0
        %408 = vmatpush1.msra.mxu0 %v312
        %409 = vmatprep.mubr.f32.mxu0 %v278
        %410 = vmatmul.mubr.f32.gmra.mrb[0].mxu0 %v277
        %v411 = vpop.f32.mrb[0].mxu0
        %v412 = vadd.f32 0.0, %v411
        %v413 = vpop.f32.mrb[0].mxu0
        %414 = vdwg.mxu0
        %415 = vmatprep.subr.mxu0 0.0
        %416 = vmatpush1.msra.mxu0 %v313
        %417 = vmatprep.subr.mxu0 0.0
        %418 = vmatpush1.msra.mxu0 %v314
        %419 = vmatprep.subr.mxu0 0.0
        %420 = vmatpush1.msra.mxu0 %v315
        %421 = vmatprep.subr.mxu0 0.0
        %422 = vmatpush1.msra.mxu0 %v316
        %423 = vmatprep.subr.mxu0 0.0
        %424 = vmatpush1.msra.mxu0 %v317
        %425 = vmatprep.subr.mxu0 0.0
        %426 = vmatpush1.msra.mxu0 %v318
        %427 = vmatprep.subr.mxu0 0.0
        %428 = vmatpush1.msra.mxu0 %v319
        %429 = vmatprep.subr.mxu0 0.0
        %430 = vmatpush1.msra.mxu0 %v320
        %431 = vmatprep.subr.mxu0 0.0
        %432 = vmatpush1.msra.mxu0 %v321
        %433 = vmatprep.subr.mxu0 0.0
        %434 = vmatpush1.msra.mxu0 %v322
        %435 = vmatprep.subr.mxu0 0.0
        %436 = vmatpush1.msra.mxu0 %v323
        %437 = vmatprep.subr.mxu0 0.0
        %438 = vmatpush1.msra.mxu0 %v324
        %439 = vmatprep.subr.mxu0 0.0
        %440 = vmatpush1.msra.mxu0 %v325
        %441 = vmatprep.subr.mxu0 0.0
        %442 = vmatpush1.msra.mxu0 %v326
        %443 = vmatprep.subr.mxu0 0.0
        %444 = vmatpush1.msra.mxu0 %v327
        %445 = vmatprep.subr.mxu0 0.0
        %446 = vmatpush1.msra.mxu0 %v328
        %447 = vmatprep.subr.mxu0 0.0
        %448 = vmatpush1.msra.mxu0 %v329
        %449 = vmatprep.subr.mxu0 0.0
        %450 = vmatpush1.msra.mxu0 %v330
        %451 = vmatprep.subr.mxu0 0.0
        %452 = vmatpush1.msra.mxu0 %v331
        %453 = vmatprep.subr.mxu0 0.0
        %454 = vmatpush1.msra.mxu0 %v332
        %455 = vmatprep.subr.mxu0 0.0
        %456 = vmatpush1.msra.mxu0 %v333
        %457 = vmatprep.subr.mxu0 0.0
        %458 = vmatpush1.msra.mxu0 %v334
        %459 = vmatprep.subr.mxu0 0.0
        %460 = vmatpush1.msra.mxu0 %v335
        %461 = vmatprep.subr.mxu0 0.0
        %462 = vmatpush1.msra.mxu0 %v336
        %463 = vmatprep.subr.mxu0 0.0
        %464 = vmatpush1.msra.mxu0 %v337
        %465 = vmatprep.subr.mxu0 0.0
        %466 = vmatpush1.msra.mxu0 %v338
        %467 = vmatprep.subr.mxu0 0.0
        %468 = vmatpush1.msra.mxu0 %v339
        %469 = vmatprep.subr.mxu0 0.0
        %470 = vmatpush1.msra.mxu0 %v340
        %471 = vmatprep.subr.mxu0 0.0
        %472 = vmatpush1.msra.mxu0 %v341
        %473 = vmatprep.subr.mxu0 0.0
        %474 = vmatpush1.msra.mxu0 %v342
        %475 = vmatprep.subr.mxu0 0.0
        %476 = vmatpush1.msra.mxu0 %v343
        %477 = vmatprep.subr.mxu0 0.0
        %478 = vmatpush1.msra.mxu0 %v344
        %479 = vmatprep.mubr.f32.mxu0 %v280
        %480 = vmatmul.mubr.f32.gmra.mrb[0].mxu0 %v279
        %v481 = vpop.f32.mrb[0].mxu0
        %v482 = vadd.f32 %v412, %v481
        %v483 = vpop.f32.mrb[0].mxu0
        %484 = vdwg.mxu0
        %v485 = vld [vmem:[%s3] sm:$0xff]
        %v486 = vld [vmem:[%s3 + $0x8] sm:$0xff]
        %v487 = vld [vmem:[%s4] sm:$0x1]
        %v489 = vlaneseq
        %v490 = vshrl.u32 %v489, 7
        %v491 = vsub.s32 0, %v490
        %v492 = vrot.slane %v487, %v491
        %vm494 = vcmask 130048
        %v496 = vsel %vm494, %v482, 0
        %498 = vmatprep.subr.mxu0 0.0
        %499 = vmatpush1.msra.mxu0 %v485
        %500 = vmatprep.subr.mxu0 0.0
        %501 = vmatpush1.msra.mxu0 %v486
        %502 = vmatprep.subr.mxu0 0.0
        %503 = vmatpush1.msra.mxu0 0.0
        %504 = vmatprep.subr.mxu0 0.0
        %505 = vmatpush1.msra.mxu0 0.0
        %506 = vmatprep.subr.mxu0 0.0
        %507 = vmatpush1.msra.mxu0 0.0
        %508 = vmatprep.subr.mxu0 0.0
        %509 = vmatpush1.msra.mxu0 0.0
        %510 = vmatprep.subr.mxu0 0.0
        %511 = vmatpush1.msra.mxu0 0.0
        %512 = vmatprep.subr.mxu0 0.0
        %513 = vmatpush1.msra.mxu0 0.0
        %514 = vmatprep.subr.mxu0 0.0
        %515 = vmatpush1.msra.mxu0 0.0
        %516 = vmatprep.subr.mxu0 0.0
        %517 = vmatpush1.msra.mxu0 0.0
        %518 = vmatprep.subr.mxu0 0.0
        %519 = vmatpush1.msra.mxu0 0.0
        %520 = vmatprep.subr.mxu0 0.0
        %521 = vmatpush1.msra.mxu0 0.0
        %522 = vmatprep.subr.mxu0 0.0
        %523 = vmatpush1.msra.mxu0 0.0
        %524 = vmatprep.subr.mxu0 0.0
        %525 = vmatpush1.msra.mxu0 0.0
        %526 = vmatprep.subr.mxu0 0.0
        %527 = vmatpush1.msra.mxu0 0.0
        %528 = vmatprep.subr.mxu0 0.0
        %529 = vmatpush1.msra.mxu0 0.0
        %530 = vmatprep.subr.mxu0 0.0
        %531 = vmatpush1.msra.mxu0 0.0
        %532 = vmatprep.subr.mxu0 0.0
        %533 = vmatpush1.msra.mxu0 0.0
        %534 = vmatprep.subr.mxu0 0.0
        %535 = vmatpush1.msra.mxu0 0.0
        %536 = vmatprep.subr.mxu0 0.0
        %537 = vmatpush1.msra.mxu0 0.0
        %538 = vmatprep.subr.mxu0 0.0
        %539 = vmatpush1.msra.mxu0 0.0
        %540 = vmatprep.subr.mxu0 0.0
        %541 = vmatpush1.msra.mxu0 0.0
        %542 = vmatprep.subr.mxu0 0.0
        %543 = vmatpush1.msra.mxu0 0.0
        %544 = vmatprep.subr.mxu0 0.0
        %545 = vmatpush1.msra.mxu0 0.0
        %546 = vmatprep.subr.mxu0 0.0
        %547 = vmatpush1.msra.mxu0 0.0
        %548 = vmatprep.subr.mxu0 0.0
        %549 = vmatpush1.msra.mxu0 0.0
        %550 = vmatprep.subr.mxu0 0.0
        %551 = vmatpush1.msra.mxu0 0.0
        %552 = vmatprep.subr.mxu0 0.0
        %553 = vmatpush1.msra.mxu0 0.0
        %554 = vmatprep.subr.mxu0 0.0
        %555 = vmatpush1.msra.mxu0 0.0
        %556 = vmatprep.subr.mxu0 0.0
        %557 = vmatpush1.msra.mxu0 0.0
        %558 = vmatprep.subr.mxu0 0.0
        %559 = vmatpush1.msra.mxu0 0.0
        %560 = vmatprep.subr.mxu0 0.0
        %561 = vmatpush1.msra.mxu0 0.0
        %562 = vmatprep.mubr.f32.mxu0 0.0
        %563 = vmatmul.mubr.f32.gmra.mrb[0].mxu0 %v496
        %v564 = vpop.f32.mrb[0].mxu0
        %v565 = vadd.f32 %v492, %v564
        %v566 = vpop.f32.mrb[0].mxu0
        %567 = vdwg.mxu0
        %v568 = vmax.f32 %v565, 0.0
        %v569 = vld [vmem:[%s5] sm:$0x3]
        %v570 = vld [vmem:[%s6] sm:$0x1]
        %v572 = vlaneseq
        %v573 = vshrl.u32 %v572, 7
        %v574 = vsub.s32 0, %v573
        %v575 = vrot.slane %v570, %v574
        %vm577 = vcmask 15360
        %v579 = vsel %vm577, %v568, 0
        %vm581 = vcmask 1041408
        %v583 = vsel %vm581, %v569, 0
        %585 = vmatprep.subr.mxu0 0.0
        %586 = vmatpush1.msra.mxu0 %v583
        %587 = vmatprep.subr.mxu0 0.0
        %588 = vmatpush1.msra.mxu0 0.0
        %589 = vmatprep.subr.mxu0 0.0
        %590 = vmatpush1.msra.mxu0 0.0
        %591 = vmatprep.subr.mxu0 0.0
        %592 = vmatpush1.msra.mxu0 0.0
        %593 = vmatprep.subr.mxu0 0.0
        %594 = vmatpush1.msra.mxu0 0.0
        %595 = vmatprep.subr.mxu0 0.0
        %596 = vmatpush1.msra.mxu0 0.0
        %597 = vmatprep.subr.mxu0 0.0
        %598 = vmatpush1.msra.mxu0 0.0
        %599 = vmatprep.subr.mxu0 0.0
        %600 = vmatpush1.msra.mxu0 0.0
        %601 = vmatprep.subr.mxu0 0.0
        %602 = vmatpush1.msra.mxu0 0.0
        %603 = vmatprep.subr.mxu0 0.0
        %604 = vmatpush1.msra.mxu0 0.0
        %605 = vmatprep.subr.mxu0 0.0
        %606 = vmatpush1.msra.mxu0 0.0
        %607 = vmatprep.subr.mxu0 0.0
        %608 = vmatpush1.msra.mxu0 0.0
        %609 = vmatprep.subr.mxu0 0.0
        %610 = vmatpush1.msra.mxu0 0.0
        %611 = vmatprep.subr.mxu0 0.0
        %612 = vmatpush1.msra.mxu0 0.0
        %613 = vmatprep.subr.mxu0 0.0
        %614 = vmatpush1.msra.mxu0 0.0
        %615 = vmatprep.subr.mxu0 0.0
        %616 = vmatpush1.msra.mxu0 0.0
        %617 = vmatprep.subr.mxu0 0.0
        %618 = vmatpush1.msra.mxu0 0.0
        %619 = vmatprep.subr.mxu0 0.0
        %620 = vmatpush1.msra.mxu0 0.0
        %621 = vmatprep.subr.mxu0 0.0
        %622 = vmatpush1.msra.mxu0 0.0
        %623 = vmatprep.subr.mxu0 0.0
        %624 = vmatpush1.msra.mxu0 0.0
        %625 = vmatprep.subr.mxu0 0.0
        %626 = vmatpush1.msra.mxu0 0.0
        %627 = vmatprep.subr.mxu0 0.0
        %628 = vmatpush1.msra.mxu0 0.0
        %629 = vmatprep.subr.mxu0 0.0
        %630 = vmatpush1.msra.mxu0 0.0
        %631 = vmatprep.subr.mxu0 0.0
        %632 = vmatpush1.msra.mxu0 0.0
        %633 = vmatprep.subr.mxu0 0.0
        %634 = vmatpush1.msra.mxu0 0.0
        %635 = vmatprep.subr.mxu0 0.0
        %636 = vmatpush1.msra.mxu0 0.0
        %637 = vmatprep.subr.mxu0 0.0
        %638 = vmatpush1.msra.mxu0 0.0
        %639 = vmatprep.subr.mxu0 0.0
        %640 = vmatpush1.msra.mxu0 0.0
        %641 = vmatprep.subr.mxu0 0.0
        %642 = vmatpush1.msra.mxu0 0.0
        %643 = vmatprep.subr.mxu0 0.0
        %644 = vmatpush1.msra.mxu0 0.0
        %645 = vmatprep.subr.mxu0 0.0
        %646 = vmatpush1.msra.mxu0 0.0
        %647 = vmatprep.subr.mxu0 0.0
        %648 = vmatpush1.msra.mxu0 0.0
        %649 = vmatprep.mubr.f32.mxu0 0.0
        %650 = vmatmul.mubr.f32.gmra.mrb[0].mxu0 %v579
        %v651 = vpop.f32.mrb[0].mxu0
        %v652 = vadd.f32 %v575, %v651
        %v653 = vpop.f32.mrb[0].mxu0
        %654 = vdwg.mxu0
        %v655 = vxor.u32 %v652, 2147483648
        %v656 = vmul.f32 %v655, 1.442695
        %v657 = vpow.pop %v656
        %v658 = vadd.f32 %v657, 1.0
        %v659 = vrcp.pop %v658
        %v660 = vmul.f32 1.0, %v659
        %v661 = vld [vmem:[%s2] sm:$0xff]
        %v662 = vld [vmem:[%s2 + $0x8] sm:$0xff]
        %v663 = vld [vmem:[%s2 + $0x10] sm:$0xff]
        %v664 = vld [vmem:[%s2 + $0x18] sm:$0xff]
        %v665 = vld [vmem:[%s2 + $0x20] sm:$0xff]
        %v666 = vld [vmem:[%s2 + $0x28] sm:$0xff]
        %v667 = vld [vmem:[%s2 + $0x30] sm:$0xff]
        %v668 = vld [vmem:[%s2 + $0x38] sm:$0xff]
        %v670 = vsel %vm494, %v660, 0
        %672 = vmatprep.subr.mxu0 %v662
        %673 = vmatpush1.msra.mxu0 %v661
        %674 = vmatprep.subr.mxu0 %v666
        %675 = vmatpush1.msra.mxu0 %v665
        %676 = vmatprep.subr.mxu0 0.0
        %677 = vmatpush1.msra.mxu0 0.0
        %678 = vmatprep.subr.mxu0 0.0
        %679 = vmatpush1.msra.mxu0 0.0
        %680 = vmatprep.subr.mxu0 0.0
        %681 = vmatpush1.msra.mxu0 0.0
        %682 = vmatprep.subr.mxu0 0.0
        %683 = vmatpush1.msra.mxu0 0.0
        %684 = vmatprep.subr.mxu0 0.0
        %685 = vmatpush1.msra.mxu0 0.0
        %686 = vmatprep.subr.mxu0 0.0
        %687 = vmatpush1.msra.mxu0 0.0
        %688 = vmatprep.subr.mxu0 0.0
        %689 = vmatpush1.msra.mxu0 0.0
        %690 = vmatprep.subr.mxu0 0.0
        %691 = vmatpush1.msra.mxu0 0.0
        %692 = vmatprep.subr.mxu0 0.0
        %693 = vmatpush1.msra.mxu0 0.0
        %694 = vmatprep.subr.mxu0 0.0
        %695 = vmatpush1.msra.mxu0 0.0
        %696 = vmatprep.subr.mxu0 0.0
        %697 = vmatpush1.msra.mxu0 0.0
        %698 = vmatprep.subr.mxu0 0.0
        %699 = vmatpush1.msra.mxu0 0.0
        %700 = vmatprep.subr.mxu0 0.0
        %701 = vmatpush1.msra.mxu0 0.0
        %702 = vmatprep.subr.mxu0 0.0
        %703 = vmatpush1.msra.mxu0 0.0
        %704 = vmatprep.subr.mxu0 0.0
        %705 = vmatpush1.msra.mxu0 0.0
        %706 = vmatprep.subr.mxu0 0.0
        %707 = vmatpush1.msra.mxu0 0.0
        %708 = vmatprep.subr.mxu0 0.0
        %709 = vmatpush1.msra.mxu0 0.0
        %710 = vmatprep.subr.mxu0 0.0
        %711 = vmatpush1.msra.mxu0 0.0
        %712 = vmatprep.subr.mxu0 0.0
        %713 = vmatpush1.msra.mxu0 0.0
        %714 = vmatprep.subr.mxu0 0.0
        %715 = vmatpush1.msra.mxu0 0.0
        %716 = vmatprep.subr.mxu0 0.0
        %717 = vmatpush1.msra.mxu0 0.0
        %718 = vmatprep.subr.mxu0 0.0
        %719 = vmatpush1.msra.mxu0 0.0
        %720 = vmatprep.subr.mxu0 0.0
        %721 = vmatpush1.msra.mxu0 0.0
        %722 = vmatprep.subr.mxu0 0.0
        %723 = vmatpush1.msra.mxu0 0.0
        %724 = vmatprep.subr.mxu0 0.0
        %725 = vmatpush1.msra.mxu0 0.0
        %726 = vmatprep.subr.mxu0 0.0
        %727 = vmatpush1.msra.mxu0 0.0
        %728 = vmatprep.subr.mxu0 0.0
        %729 = vmatpush1.msra.mxu0 0.0
        %730 = vmatprep.subr.mxu0 0.0
        %731 = vmatpush1.msra.mxu0 0.0
        %732 = vmatprep.subr.mxu0 0.0
        %733 = vmatpush1.msra.mxu0 0.0
        %734 = vmatprep.subr.mxu0 0.0
        %735 = vmatpush1.msra.mxu0 0.0
        %736 = vmatprep.mubr.f32.mxu0 0.0
        %737 = vmatmul.mubr.f32.gmra.mrb[0].mxu0 %v670
        %v738 = vpop.f32.mrb[0].mxu0
        %v739 = vadd.f32 0.0, %v738
        %v740 = vpop.f32.mrb[0].mxu0
        %v741 = vadd.f32 0.0, %v740
        %742 = vdwg.mxu0
        %743 = vmatprep.subr.mxu0 %v664
        %744 = vmatpush1.msra.mxu0 %v663
        %745 = vmatprep.subr.mxu0 %v668
        %746 = vmatpush1.msra.mxu0 %v667
        %747 = vmatprep.subr.mxu0 0.0
        %748 = vmatpush1.msra.mxu0 0.0
        %749 = vmatprep.subr.mxu0 0.0
        %750 = vmatpush1.msra.mxu0 0.0
        %751 = vmatprep.subr.mxu0 0.0
        %752 = vmatpush1.msra.mxu0 0.0
        %753 = vmatprep.subr.mxu0 0.0
        %754 = vmatpush1.msra.mxu0 0.0
        %755 = vmatprep.subr.mxu0 0.0
        %756 = vmatpush1.msra.mxu0 0.0
        %757 = vmatprep.subr.mxu0 0.0
        %758 = vmatpush1.msra.mxu0 0.0
        %759 = vmatprep.subr.mxu0 0.0
        %760 = vmatpush1.msra.mxu0 0.0
        %761 = vmatprep.subr.mxu0 0.0
        %762 = vmatpush1.msra.mxu0 0.0
        %763 = vmatprep.subr.mxu0 0.0
        %764 = vmatpush1.msra.mxu0 0.0
        %765 = vmatprep.subr.mxu0 0.0
        %766 = vmatpush1.msra.mxu0 0.0
        %767 = vmatprep.subr.mxu0 0.0
        %768 = vmatpush1.msra.mxu0 0.0
        %769 = vmatprep.subr.mxu0 0.0
        %770 = vmatpush1.msra.mxu0 0.0
        %771 = vmatprep.subr.mxu0 0.0
        %772 = vmatpush1.msra.mxu0 0.0
        %773 = vmatprep.subr.mxu0 0.0
        %774 = vmatpush1.msra.mxu0 0.0
        %775 = vmatprep.subr.mxu0 0.0
        %776 = vmatpush1.msra.mxu0 0.0
        %777 = vmatprep.subr.mxu0 0.0
        %778 = vmatpush1.msra.mxu0 0.0
        %779 = vmatprep.subr.mxu0 0.0
        %780 = vmatpush1.msra.mxu0 0.0
        %781 = vmatprep.subr.mxu0 0.0
        %782 = vmatpush1.msra.mxu0 0.0
        %783 = vmatprep.subr.mxu0 0.0
        %784 = vmatpush1.msra.mxu0 0.0
        %785 = vmatprep.subr.mxu0 0.0
        %786 = vmatpush1.msra.mxu0 0.0
        %787 = vmatprep.subr.mxu0 0.0
        %788 = vmatpush1.msra.mxu0 0.0
        %789 = vmatprep.subr.mxu0 0.0
        %790 = vmatpush1.msra.mxu0 0.0
        %791 = vmatprep.subr.mxu0 0.0
        %792 = vmatpush1.msra.mxu0 0.0
        %793 = vmatprep.subr.mxu0 0.0
        %794 = vmatpush1.msra.mxu0 0.0
        %795 = vmatprep.subr.mxu0 0.0
        %796 = vmatpush1.msra.mxu0 0.0
        %797 = vmatprep.subr.mxu0 0.0
        %798 = vmatpush1.msra.mxu0 0.0
        %799 = vmatprep.subr.mxu0 0.0
        %800 = vmatpush1.msra.mxu0 0.0
        %801 = vmatprep.subr.mxu0 0.0
        %802 = vmatpush1.msra.mxu0 0.0
        %803 = vmatprep.subr.mxu0 0.0
        %804 = vmatpush1.msra.mxu0 0.0
        %805 = vmatprep.subr.mxu0 0.0
        %806 = vmatpush1.msra.mxu0 0.0
        %807 = vmatprep.mubr.f32.mxu0 0.0
        %808 = vmatmul.mubr.f32.gmra.mrb[0].mxu0 %v670
        %v809 = vpop.f32.mrb[0].mxu0
        %v810 = vadd.f32 0.0, %v809
        %v811 = vpop.f32.mrb[0].mxu0
        %v812 = vadd.f32 0.0, %v811
        %813 = vdwg.mxu0
        %v814 = vmul.f32 %v277, %v739
        %v815 = vmul.f32 %v278, %v741
        %v816 = vmul.f32 %v279, %v810
        %v817 = vmul.f32 %v280, %v812
        %818 = vst [vmem:[%s271] sm:$0xff] %v814
        %819 = vst [vmem:[%s271 + $0x8] sm:$0xff] %v815
        %820 = vst [vmem:[%s271 + $0x10] sm:$0xff] %v816
        %821 = vst [vmem:[%s271 + $0x18] sm:$0xff] %v817
        %s822 = sand.u32 %s181, 1
        %s823 = scalar_lea.sflag [#allocation3], %s822
        %s824 = sand.u32 %s181, 1
        %s825 = smul.addr %s824, 32
        %s826 = scalar_lea.vmem [#allocation2], %s825
        // Predicated region
        $region49: #{tpu_custom_call.1} parent=47 // pred_check
          %p827 = pneg %p191
        $region50: #{tpu_custom_call.1} parent=47 // pred_check_branch
          %829 = sbr.rel (%p827) target = $region52
        $region51: #{tpu_custom_call.1} parent=47 // pred_region
          %s831 = ssub.s32 512, 512
          %832 = vsyncadd %s823, %s831
          %s833 = smul.addr %s21, 4
          %s834 = smul.addr %s833, 128
          %s835 = scalar_lea.hbm %s7, %s834
          %s837 = sshll.u32 %s826, 4
          %s838 = int_to_ptr.vmem [resolvable:$true] %s837
          %840 = dma.vmem_to_hbm [thread:$0]  %s838, 512, %s835, %s823
        $region52: #{tpu_custom_call.1} parent=47 // pred_fallthru
          _
      $region48: #{tpu_custom_call.1} parent=5 // pred_fallthru
        _
      %p841 = scmp.le.s32.totalorder 2, %s16
      // Predicated region
      $region53: #{tpu_custom_call.1} parent=5 // pred_check
        %p842 = pneg %p841
      $region54: #{tpu_custom_call.1} parent=5 // pred_check_branch
        %844 = sbr.rel (%p842) target = $region56
      $region55: #{tpu_custom_call.1} parent=5 // pred_region
        %s845 = ssub.s32 %s16, 2
        // Predicated region
        $region57: #{tpu_custom_call.1} parent=55 // pred_check
          %p846 = pneg %p197
        $region58: #{tpu_custom_call.1} parent=55 // pred_check_branch
          %848 = sbr.rel (%p846) target = $region60
        $region59: #{tpu_custom_call.1} parent=55 // pred_region
          %s849 = sand.u32 %s182, 1
          %s850 = scalar_lea.sflag [#allocation3], %s849
          %s851 = sand.u32 %s182, 1
          %s852 = smul.addr %s851, 32
          %s853 = scalar_lea.vmem [#allocation2], %s852
          %854 = dma.done %s850, 512
        $region60: #{tpu_custom_call.1} parent=55 // pred_fallthru
          _
      $region56: #{tpu_custom_call.1} parent=5 // pred_fallthru
        _
    $region6: #{tpu_custom_call.1} parent=1 // loop_footer
      %s20 = sadd.s32 1, %s16
    $region7: #{tpu_custom_call.1} parent=1 // loop_footer_branch
      %15 = sbr.rel target = $region3
    $region8: #{tpu_custom_call.1} parent=1 // loop_exit
      _
    %855 = vsyncpa [#allocation3], 1
    %s856 = scalar_lea.sflag [#allocation3], 1
    %857 = vsyncpa %s856, 1

</llo_original>
